<compile_context>
chip_gen: v5e
topology: v5e:2x2
jax: 0.10.0
libtpu: 0.0.40
codegen_flags: <defaults>
</compile_context>

<pallas_src>
import functools

import jax
import jax.numpy as jnp
from jax.experimental import pallas as pl
from jax.experimental.pallas import tpu as pltpu


_LANE = 128
_SUBLANE = 8


def _dice_kernel(x_ref, y_ref, inter_ref, sxy_ref, *,
                 valid_rows, block_rows, mask_last):
    """Accumulates (8,128) f32 partials of sum(x*y) and sum(x+y)."""
    i = pl.program_id(0)

    @pl.when(i == 0)
    def _():
        inter_ref[...] = jnp.zeros_like(inter_ref)
        sxy_ref[...] = jnp.zeros_like(sxy_ref)

    def _accum(x, y):
        # Group rows into (8,128) vregs and accumulate with pure VPU adds;
        # the single cross-lane reduce happens once, in the wrapper epilogue.
        prod = (x * y).reshape(block_rows // _SUBLANE, _SUBLANE, _LANE)
        sxy = (x + y).reshape(block_rows // _SUBLANE, _SUBLANE, _LANE)
        inter_ref[...] += jnp.sum(prod, axis=0)
        sxy_ref[...] += jnp.sum(sxy, axis=0)

    if not mask_last:
        # Common case: every block is full -> no mask / iota work at all.
        _accum(x_ref[...].astype(jnp.float32), y_ref[...].astype(jnp.float32))
    else:
        last = pl.num_programs(0) - 1

        @pl.when(i != last)
        def _():
            _accum(x_ref[...].astype(jnp.float32),
                   y_ref[...].astype(jnp.float32))

        @pl.when(i == last)
        def _():
            # Partial last block: rows past `valid_rows` hold garbage from the
            # partial DMA and must be zeroed before accumulation.
            row0 = i * block_rows
            local = jax.lax.broadcasted_iota(jnp.int32, (block_rows, 1), 0)
            m = (row0 + local) < valid_rows
            _accum(jnp.where(m, x_ref[...].astype(jnp.float32), 0.0),
                   jnp.where(m, y_ref[...].astype(jnp.float32), 0.0))


def dice_loss(inputs, targets, smooth=1.0, *, block_rows=8192):
    """Pallas implementation of DiceLoss.forward.  Returns a scalar f32."""
    assert inputs.shape == targets.shape

    def _flat(a):
        a = a.reshape(-1)
        # Stream floating/integer inputs at native width; only bool is
        # widened (to int8, 1 B/elem) since i1 streaming is not worth it.
        if jnp.issubdtype(a.dtype, jnp.bool_):
            a = a.astype(jnp.int8)
        return a

    x = _flat(inputs)
    y = _flat(targets)
    n = x.shape[0]

    tile_unit = _SUBLANE * _LANE                    # 1024
    n_aligned = (n // tile_unit) * tile_unit

    # Ragged tail (< 1024 elements): tiny wrapper-side sums, no full-array
    # jnp.pad copy in HBM.
    tail_inter = jnp.float32(0.0)
    tail_sxy = jnp.float32(0.0)
    if n_aligned != n:
        xt = x[n_aligned:].astype(jnp.float32)
        yt = y[n_aligned:].astype(jnp.float32)
        tail_inter = jnp.sum(xt * yt)
        tail_sxy = jnp.sum(xt) + jnp.sum(yt)

    if n_aligned == 0:
        inter = tail_inter
        sxy = tail_sxy
    else:
        rows = n_aligned // _LANE                   # multiple of 8
        x2 = x[:n_aligned].reshape(rows, _LANE)
        y2 = y[:n_aligned].reshape(rows, _LANE)

        # Sublane alignment of the block: 8 for 32-bit, 16 for bf16, 32 for
        # int8 -- so narrow dtypes keep legal (sub-32-bit) tilings.
        row_align = max(32 // jnp.dtype(x2.dtype).itemsize,
                        32 // jnp.dtype(y2.dtype).itemsize)
        if rows <= block_rows:
            eff_block = rows                        # whole array = one block
        else:
            eff_block = max(row_align, (int(block_rows) // row_align) * row_align)

        num_blocks = int(pl.cdiv(rows, eff_block))
        mask_last = (rows % eff_block) != 0         # only last block may be partial

        kernel = functools.partial(
            _dice_kernel,
            valid_rows=rows, block_rows=eff_block, mask_last=mask_last)

        part_shape = jax.ShapeDtypeStruct((_SUBLANE, _LANE), jnp.float32)
        part_spec = pl.BlockSpec((_SUBLANE, _LANE), lambda i: (0, 0))

        bytes_accessed = (x2.size * jnp.dtype(x2.dtype).itemsize
                          + y2.size * jnp.dtype(y2.dtype).itemsize
                          + 2 * _SUBLANE * _LANE * 4)

        inter_parts, sxy_parts = pl.pallas_call(
            kernel,
            out_shape=(part_shape, part_shape),
            grid_spec=pltpu.PrefetchScalarGridSpec(
                num_scalar_prefetch=0,
                grid=(num_blocks,),
                in_specs=[
                    pl.BlockSpec((eff_block, _LANE), lambda i: (i, 0)),
                    pl.BlockSpec((eff_block, _LANE), lambda i: (i, 0)),
                ],
                out_specs=(part_spec, part_spec),
            ),
            compiler_params=pltpu.CompilerParams(
                dimension_semantics=("arbitrary",),
                vmem_limit_bytes=32 * 1024 * 1024,
            ),
            cost_estimate=pl.CostEstimate(
                flops=4 * n_aligned, transcendentals=0,
                bytes_accessed=bytes_accessed),
        )(x2, y2)

        # Tiny epilogue: cross-lane reduce of the (8,128) partials.
        inter = jnp.sum(inter_parts) + tail_inter
        sxy = jnp.sum(sxy_parts) + tail_sxy

    smooth = jnp.float32(smooth)
    return 1.0 - (2.0 * inter + smooth) / (sxy + smooth)


def dice_loss_ref(inputs, targets, smooth=1.0):
    x = inputs.reshape(-1).astype(jnp.float32)
    y = targets.reshape(-1).astype(jnp.float32)
    inter = jnp.sum(x * y)
    return 1.0 - (2.0 * inter + smooth) / (jnp.sum(x) + jnp.sum(y) + smooth)


if __name__ == "__main__":
    key = jax.random.PRNGKey(0)
    k1, k2, k3, k4, k5, k6 = jax.random.split(key, 6)

    # 1) Small NCHW segmentation-head shape, f32 probs vs f32 targets
    #    (single full block, mask-free path).
    shape = (2, 4, 16, 16)
    inputs = jax.nn.sigmoid(jax.random.normal(k1, shape, dtype=jnp.float32))
    targets = (jax.random.uniform(k2, shape) > 0.5).astype(jnp.float32)
    out = jax.block_until_ready(dice_loss(inputs, targets, smooth=1.0))
    ref = dice_loss_ref(inputs, targets, smooth=1.0)
    assert jnp.allclose(out, ref, atol=1e-5, rtol=1e-5), (out, ref)

    # 2) Ragged size, f32 probs vs native bool mask (multi-block grid,
    #    pl.when-masked partial last block, <1024-element tail in epilogue).
    shape2 = (2, 5, 33, 33)
    inputs2 = jax.nn.sigmoid(jax.random.normal(k3, shape2, dtype=jnp.float32))
    targets2 = jax.random.uniform(k4, shape2) > 0.5      # bool -> int8 stream
    out2 = jax.block_until_ready(
        dice_loss(inputs2, targets2, smooth=1.0, block_rows=32))
    ref2 = dice_loss_ref(inputs2, targets2, smooth=1.0)
    assert jnp.allclose(out2, ref2, atol=1e-4, rtol=1e-4), (out2, ref2)

    # 3) Native bf16 streaming, several full (mask-free) blocks.
    shape3 = (4, 4, 32, 32)
    inputs3 = jax.nn.sigmoid(jax.random.normal(k5, shape3)).astype(jnp.bfloat16)
    targets3 = (jax.random.uniform(k6, shape3) > 0.5).astype(jnp.bfloat16)
    out3 = jax.block_until_ready(
        dice_loss(inputs3, targets3, smooth=1.0, block_rows=32))
    ref3 = dice_loss_ref(inputs3, targets3, smooth=1.0)
    assert jnp.allclose(out3, ref3, atol=1e-4, rtol=1e-4), (out3, ref3)

    print("KERNEL_OK")
</pallas_src>

<mosaic_0001>
module attributes {stable_mosaic.version = 11 : i64} {
  func.func @_dice_kernel(%arg0: i32, %arg1: memref<16x128xf32, #tpu.memory_space<vmem>>, %arg2: memref<16x128xf32, #tpu.memory_space<vmem>>, %arg3: memref<8x128xf32, #tpu.memory_space<vmem>>, %arg4: memref<8x128xf32, #tpu.memory_space<vmem>>) attributes {dimension_semantics = [#tpu.dimension_semantics<arbitrary>], iteration_bounds = array<i64: 1>, scalar_prefetch = 0 : i64, scratch_operands = 0 : i64, tpu.core_type = #tpu.core_type<tc>, window_params = [{transform_indices = @transform_0, window_bounds = array<i64: 16, 128>}, {transform_indices = @transform_1, window_bounds = array<i64: 16, 128>}, {pipeline_mode = #tpu.pipeline_mode<synchronous>, transform_indices = @transform_2, window_bounds = array<i64: 8, 128>}, {pipeline_mode = #tpu.pipeline_mode<synchronous>, transform_indices = @transform_3, window_bounds = array<i64: 8, 128>}]} {
    %c0_i32 = arith.constant 0 : i32
    %0 = arith.cmpi eq, %arg0, %c0_i32 : i32
    %1 = arith.extui %0 : i1 to i32
    %c0_i32_0 = arith.constant 0 : i32
    %2 = arith.cmpi ne, %1, %c0_i32_0 : i32
    scf.if %2 {
      %cst_13 = arith.constant 0.000000e+00 : f32
      %17 = vector.broadcast %cst_13 : f32 to vector<8x128xf32>
      %c0_14 = arith.constant 0 : index
      %c0_15 = arith.constant 0 : index
      %18 = vector.load %arg3[%c0_14, %c0_15] : memref<8x128xf32, #tpu.memory_space<vmem>>, vector<8x128xf32>
      tpu.vector_store %arg3[%c0_14, %c0_15], %17 {strides = array<i32>} : memref<8x128xf32, #tpu.memory_space<vmem>>, vector<8x128xf32>,
      %cst_16 = arith.constant 0.000000e+00 : f32
      %19 = vector.broadcast %cst_16 : f32 to vector<8x128xf32>
      %c0_17 = arith.constant 0 : index
      %c0_18 = arith.constant 0 : index
      %20 = vector.load %arg4[%c0_17, %c0_18] : memref<8x128xf32, #tpu.memory_space<vmem>>, vector<8x128xf32>
      tpu.vector_store %arg4[%c0_17, %c0_18], %19 {strides = array<i32>} : memref<8x128xf32, #tpu.memory_space<vmem>>, vector<8x128xf32>,
    } else {
    }
    %c0 = arith.constant 0 : index
    %c0_1 = arith.constant 0 : index
    %3 = vector.load %arg1[%c0, %c0_1] : memref<16x128xf32, #tpu.memory_space<vmem>>, vector<16x128xf32>
    %c0_2 = arith.constant 0 : index
    %c0_3 = arith.constant 0 : index
    %4 = vector.load %arg2[%c0_2, %c0_3] : memref<16x128xf32, #tpu.memory_space<vmem>>, vector<16x128xf32>
    %5 = arith.mulf %3, %4 : vector<16x128xf32>
    %6 = vector.shape_cast %5 : vector<16x128xf32> to vector<2x8x128xf32>
    %7 = arith.addf %3, %4 : vector<16x128xf32>
    %8 = vector.shape_cast %7 : vector<16x128xf32> to vector<2x8x128xf32>
    %c0_4 = arith.constant 0 : index
    %c0_5 = arith.constant 0 : index
    %9 = vector.load %arg3[%c0_4, %c0_5] : memref<8x128xf32, #tpu.memory_space<vmem>>, vector<8x128xf32>
    %cst = arith.constant dense<0.000000e+00> : vector<8x128xf32>
    %10 = vector.multi_reduction <add>, %6, %cst [0] : vector<2x8x128xf32> to vector<8x128xf32>
    %11 = arith.addf %9, %10 : vector<8x128xf32>
    %c0_6 = arith.constant 0 : index
    %c0_7 = arith.constant 0 : index
    %12 = vector.load %arg3[%c0_6, %c0_7] : memref<8x128xf32, #tpu.memory_space<vmem>>, vector<8x128xf32>
    tpu.vector_store %arg3[%c0_6, %c0_7], %11 {strides = array<i32>} : memref<8x128xf32, #tpu.memory_space<vmem>>, vector<8x128xf32>,
    %c0_8 = arith.constant 0 : index
    %c0_9 = arith.constant 0 : index
    %13 = vector.load %arg4[%c0_8, %c0_9] : memref<8x128xf32, #tpu.memory_space<vmem>>, vector<8x128xf32>
    %cst_10 = arith.constant dense<0.000000e+00> : vector<8x128xf32>
    %14 = vector.multi_reduction <add>, %8, %cst_10 [0] : vector<2x8x128xf32> to vector<8x128xf32>
    %15 = arith.addf %13, %14 : vector<8x128xf32>
    %c0_11 = arith.constant 0 : index
    %c0_12 = arith.constant 0 : index
    %16 = vector.load %arg4[%c0_11, %c0_12] : memref<8x128xf32, #tpu.memory_space<vmem>>, vector<8x128xf32>
    tpu.vector_store %arg4[%c0_11, %c0_12], %15 {strides = array<i32>} : memref<8x128xf32, #tpu.memory_space<vmem>>, vector<8x128xf32>,
    return
  }
  func.func @transform_0(%arg0: i32) -> (i32, i32) {
    %c0_i32 = arith.constant 0 : i32
    %c0_i32_0 = arith.constant 0 : i32
    return %arg0, %c0_i32 : i32, i32
  }
  func.func @transform_1(%arg0: i32) -> (i32, i32) {
    %c0_i32 = arith.constant 0 : i32
    %c0_i32_0 = arith.constant 0 : i32
    return %arg0, %c0_i32 : i32, i32
  }
  func.func @transform_2(%arg0: i32) -> (i32, i32) {
    %c0_i32 = arith.constant 0 : i32
    %c0_i32_0 = arith.constant 0 : i32
    %c0_i32_1 = arith.constant 0 : i32
    return %c0_i32, %c0_i32_0 : i32, i32
  }
  func.func @transform_3(%arg0: i32) -> (i32, i32) {
    %c0_i32 = arith.constant 0 : i32
    %c0_i32_0 = arith.constant 0 : i32
    %c0_i32_1 = arith.constant 0 : i32
    return %c0_i32, %c0_i32_0 : i32, i32
  }
}

</mosaic_0001>

<llo_original>
// kernel: tpu_custom_call.1
$region0: #{tpu_custom_call.1}
  #allocation0 [shape = 'u32[]', space=smem, size = 0x4, offset = 0x4, fixed_abs, tag = 'smem constant byte address 0x4 - core index']
  #allocation1 [shape = 'u32[72,128]{1,0:T(1,128)}', space=vmem, size = 0x9000, scoped, tag = 'internal scratch']
  %s0 = inlined_call_operand.hbm [shape: f32[16,128], index: 0, kind: input, shape index: {}]
  %s1 = inlined_call_operand.hbm [shape: f32[16,128], index: 1, kind: input, shape index: {}]
  %s2 = inlined_call_operand.hbm [shape: f32[8,128], index: 2, kind: output, shape index: {0}]
  %s3 = inlined_call_operand.hbm [shape: f32[8,128], index: 3, kind: output, shape index: {1}]
  %4 = xla_tuple %s2, %s3
  %s5 = sld [smem:[#allocation0]]
  $region38: #{tpu_custom_call.1} parent=0
    _
  %s7 = ssub.s32 1, %s5
  %s8 = scalar_select 0, %s7, %s5
  $region1: #{tpu_custom_call.1} parent=0
    #allocation2 [shape = 'u8[8192]{0}', space=vmem, size = 0x2000, scoped, tag = 'input window, operand 0, single buffered']
    #allocation3 [shape = 's32[1]{0}', space=sflag, size = 0x4, scoped, tag = 'scoped memory for tpu_custom_call.1']
    #allocation4 [shape = 's32[1]{0}', space=sflag, size = 0x4, scoped, tag = 'scoped memory for tpu_custom_call.1']
    #allocation5 [shape = 'u8[8192]{0}', space=vmem, size = 0x2000, scoped, tag = 'input window, operand 1, single buffered']
    #allocation6 [shape = 's32[1]{0}', space=sflag, size = 0x4, scoped, tag = 'scoped memory for tpu_custom_call.1']
    #allocation7 [shape = 'u8[4096]{0}', space=vmem, size = 0x1000, scoped, tag = 'output window, operand 0, single buffered']
    #allocation8 [shape = 'u8[4096]{0}', space=vmem, size = 0x1000, scoped, tag = 'output window, operand 1, single buffered']
    #allocation9 [shape = 's32[1]{0}', space=sflag, size = 0x4, scoped, tag = 'scoped memory for tpu_custom_call.1']
    %9 = vsyncpa [#allocation3], 0
    %10 = vsyncpa [#allocation6], 0
    %11 = vsyncpa [#allocation4], 0
    %12 = vsyncpa [#allocation9], 0
    // Predicated region
    $region2: #{tpu_custom_call.1} parent=1 // pred_check
      _
    $region3: #{tpu_custom_call.1} parent=1 // pred_check_branch
      %14 = sbr.rel (0) target = $region5
    $region4: #{tpu_custom_call.1} parent=1 // pred_region
      %16 = vsyncadd [#allocation3], 0
      %s17 = sshll.u32 %s0, 4
      %s18 = int_to_ptr.hbm [resolvable:$true] %s17
      %s19 = sshll.u32 [#allocation2], 4
      %s20 = int_to_ptr.vmem [resolvable:$true] %s19
      %25 = dma.hbm_to_vmem [thread:$0]  %s18, 256, %s20, [#allocation3], 128, 128, 8
    $region5: #{tpu_custom_call.1} parent=1 // pred_fallthru
      _
    // Predicated region
    $region6: #{tpu_custom_call.1} parent=1 // pred_check
      _
    $region7: #{tpu_custom_call.1} parent=1 // pred_check_branch
      %27 = sbr.rel (0) target = $region9
    $region8: #{tpu_custom_call.1} parent=1 // pred_region
      %29 = vsyncadd [#allocation6], 0
      %s30 = sshll.u32 %s1, 4
      %s31 = int_to_ptr.hbm [resolvable:$true] %s30
      %s32 = sshll.u32 [#allocation5], 4
      %s33 = int_to_ptr.vmem [resolvable:$true] %s32
      %38 = dma.hbm_to_vmem [thread:$0]  %s31, 256, %s33, [#allocation6], 128, 128, 8
    $region9: #{tpu_custom_call.1} parent=1 // pred_fallthru
      _
    // Predicated region
    $region10: #{tpu_custom_call.1} parent=1 // pred_check
      _
    $region11: #{tpu_custom_call.1} parent=1 // pred_check_branch
      %40 = sbr.rel (0) target = $region13
    $region12: #{tpu_custom_call.1} parent=1 // pred_region
      %42 = dma.done [#allocation3], 256
    $region13: #{tpu_custom_call.1} parent=1 // pred_fallthru
      _
    // Predicated region
    $region14: #{tpu_custom_call.1} parent=1 // pred_check
      _
    $region15: #{tpu_custom_call.1} parent=1 // pred_check_branch
      %44 = sbr.rel (0) target = $region17
    $region16: #{tpu_custom_call.1} parent=1 // pred_region
      %46 = dma.done [#allocation6], 256
    $region17: #{tpu_custom_call.1} parent=1 // pred_fallthru
      _
    %p47 = scmp.eq.s32.totalorder 0, 0
    // Predicated region
    $region18: #{tpu_custom_call.1} parent=1 // pred_check
      %p48 = pneg %p47
    $region19: #{tpu_custom_call.1} parent=1 // pred_check_branch
      %50 = sbr.rel (%p48) target = $region21
    $region20: #{tpu_custom_call.1} parent=1 // pred_region
      %51 = vst [vmem:[#allocation7] sm:$0xff] 0.0
      %52 = vst [vmem:[#allocation8] sm:$0xff] 0.0
    $region21: #{tpu_custom_call.1} parent=1 // pred_fallthru
      _
    %v53 = vld [vmem:[#allocation2] sm:$0xff]
    %v54 = vld [vmem:[#allocation2 + $0x8] sm:$0xff]
    %v55 = vld [vmem:[#allocation5] sm:$0xff]
    %v56 = vld [vmem:[#allocation5 + $0x8] sm:$0xff]
    %v57 = vmul.f32 %v53, %v55
    %v58 = vmul.f32 %v54, %v56
    %v59 = vadd.f32 %v53, %v55
    %v60 = vadd.f32 %v54, %v56
    %v61 = vld [vmem:[#allocation7] sm:$0xff]
    %v62 = vadd.f32 %v57, %v58
    %v63 = vadd.f32 %v61, %v62
    %64 = vst [vmem:[#allocation7] sm:$0xff] %v63
    %v65 = vld [vmem:[#allocation8] sm:$0xff]
    %v66 = vadd.f32 %v59, %v60
    %v67 = vadd.f32 %v65, %v66
    %68 = vst [vmem:[#allocation8] sm:$0xff] %v67
    // Predicated region
    $region22: #{tpu_custom_call.1} parent=1 // pred_check
      _
    $region23: #{tpu_custom_call.1} parent=1 // pred_check_branch
      %70 = sbr.rel (0) target = $region25
    $region24: #{tpu_custom_call.1} parent=1 // pred_region
      %72 = vsyncadd [#allocation4], 0
      %s74 = sshll.u32 [#allocation7], 4
      %s75 = int_to_ptr.vmem [resolvable:$true] %s74
      %s76 = sshll.u32 %s2, 4
      %s77 = int_to_ptr.hbm [resolvable:$true] %s76
      %79 = dma.vmem_to_hbm [thread:$0]  %s75, 128, %s77, [#allocation4]
    $region25: #{tpu_custom_call.1} parent=1 // pred_fallthru
      _
    // Predicated region
    $region26: #{tpu_custom_call.1} parent=1 // pred_check
      _
    $region27: #{tpu_custom_call.1} parent=1 // pred_check_branch
      %81 = sbr.rel (0) target = $region29
    $region28: #{tpu_custom_call.1} parent=1 // pred_region
      %83 = vsyncadd [#allocation9], 0
      %s85 = sshll.u32 [#allocation8], 4
      %s86 = int_to_ptr.vmem [resolvable:$true] %s85
      %s87 = sshll.u32 %s3, 4
      %s88 = int_to_ptr.hbm [resolvable:$true] %s87
      %90 = dma.vmem_to_hbm [thread:$0]  %s86, 128, %s88, [#allocation9]
    $region29: #{tpu_custom_call.1} parent=1 // pred_fallthru
      _
    // Predicated region
    $region30: #{tpu_custom_call.1} parent=1 // pred_check
      _
    $region31: #{tpu_custom_call.1} parent=1 // pred_check_branch
      %92 = sbr.rel (0) target = $region33
    $region32: #{tpu_custom_call.1} parent=1 // pred_region
      %94 = dma.done [#allocation4], 128
    $region33: #{tpu_custom_call.1} parent=1 // pred_fallthru
      _
    // Predicated region
    $region34: #{tpu_custom_call.1} parent=1 // pred_check
      _
    $region35: #{tpu_custom_call.1} parent=1 // pred_check_branch
      %96 = sbr.rel (0) target = $region37
    $region36: #{tpu_custom_call.1} parent=1 // pred_region
      %98 = dma.done [#allocation9], 128
    $region37: #{tpu_custom_call.1} parent=1 // pred_fallthru
      _
    %99 = vsyncpa [#allocation3], 1
    %100 = vsyncpa [#allocation6], 1
    %101 = vsyncpa [#allocation4], 1
    %102 = vsyncpa [#allocation9], 1

</llo_original>
